<compile_context>
chip_gen: v7x
topology: tpu7x:2x2x1
jax: 0.10.0
libtpu: 0.0.40
codegen_flags: <defaults>
</compile_context>

<pallas_src>
import jax
import jax.numpy as jnp
from jax.experimental import pallas as pl
from jax.experimental.pallas import tpu as pltpu


def _make_reduce_kernel(B, C, HW, block_hw, num_blocks, blocks_per_split,
                        num_splits):
    num_chunks = block_hw // 128
    # Tail handling is needed if the last real block is partial, or the
    # parallel split padded the grid with blocks past the end of the array.
    has_tail = (HW % block_hw != 0) or (num_splits * blocks_per_split != num_blocks)
    unroll = 4 if num_chunks >= 4 else num_chunks

    def kernel(x_ref, sum_out_ref, max_out_ref, sum_acc, max_acc):
        p = pl.program_id(0)
        k = pl.program_id(1)
        g = p * blocks_per_split + k          # global spatial-block index

        @pl.when(k == 0)
        def _init():
            sum_acc[...] = jnp.zeros(sum_acc.shape, jnp.float32)
            max_acc[...] = jnp.full(max_acc.shape, -jnp.inf, jnp.float32)

        def accumulate(masked):
            # Read the VMEM accumulators once, carry partials in registers
            # across the chunk loop, write back once.
            def body(t, carry):
                s, m = carry
                start = pl.multiple_of(t * 128, 128)
                chunk = x_ref[:, :, pl.ds(start, 128)].astype(jnp.float32)
                if masked:
                    lane = jax.lax.broadcasted_iota(jnp.int32, chunk.shape, 2)
                    pos = g * block_hw + start + lane
                    valid = pos < HW
                    s = s + jnp.where(valid, chunk, 0.0)
                    m = jnp.maximum(m, jnp.where(valid, chunk, -jnp.inf))
                else:
                    s = s + chunk
                    m = jnp.maximum(m, chunk)
                return s, m

            s, m = jax.lax.fori_loop(0, num_chunks, body,
                                     (sum_acc[...], max_acc[...]),
                                     unroll=unroll)
            sum_acc[...] = s
            max_acc[...] = m

        if has_tail:
            is_full = (g + 1) * block_hw <= HW

            @pl.when(is_full)
            def _steady():
                accumulate(masked=False)

            @pl.when(jnp.logical_not(is_full))
            def _tail():
                accumulate(masked=True)
        else:
            accumulate(masked=False)

        @pl.when(k == blocks_per_split - 1)
        def _finalize():
            # One cross-lane reduce per split; the MLP runs in a second kernel.
            sum_out_ref[0] = jnp.sum(sum_acc[...], axis=-1)
            max_out_ref[0] = jnp.max(max_acc[...], axis=-1)

    return kernel


def _make_finalize_kernel(HW):
    inv_hw = 1.0 / float(HW)

    def kernel(sum_ref, max_ref, w1_ref, w2_ref, o_ref):
        avg = jnp.sum(sum_ref[...], axis=0) * inv_hw        # (B, C)
        mx = jnp.max(max_ref[...], axis=0)                  # (B, C)
        w1 = w1_ref[...]
        w2 = w2_ref[...]

        def fc(v):
            h = jnp.maximum(
                jnp.dot(v, w1, preferred_element_type=jnp.float32), 0.0)
            return jnp.dot(h, w2, preferred_element_type=jnp.float32)

        o_ref[...] = jax.nn.sigmoid(fc(avg) + fc(mx)).astype(o_ref.dtype)

    return kernel


def _default_num_splits():
    # v7x has 2 TensorCores per chip; splitting the HBM stream across both
    # roughly doubles effective streaming bandwidth.  v5e/v6e have 1 TC.
    try:
        kind = jax.devices()[0].device_kind.lower()
    except Exception:
        return 1
    return 2 if ("v7" in kind or "tpu7" in kind) else 1


def channel_attention(x, w1, w2, *, block_hw=None, num_splits=None):
    """CBAM ChannelAttention forward.

    x : (B, C, H, W) input.
    w1: (C_hidden, C, 1, 1) first 1x1-conv weight (no bias).
    w2: (C, C_hidden, 1, 1) second 1x1-conv weight (no bias).
    Returns sigmoid(fc(avg_pool(x)) + fc(max_pool(x))), shape (B, C, 1, 1).
    """
    B, C, H, W = x.shape
    C_hidden = w1.shape[0]
    HW = H * W

    x_flat = x.reshape(B, C, HW)                              # native dtype stream
    w1_mat = w1.reshape(C_hidden, C).T.astype(jnp.float32)    # (C, C_hidden)
    w2_mat = w2.reshape(C, C_hidden).T.astype(jnp.float32)    # (C_hidden, C)

    itemsize = jnp.dtype(x_flat.dtype).itemsize
    bytes_per_lane = B * C * itemsize

    if block_hw is None:
        # Target a multi-MiB per-step x stream (per-step overhead ~0.35us),
        # keep the double-buffered stream under ~8 MiB (fits every
        # generation's scoped-VMEM default, including v5e's 16 MiB).
        stream_budget = 8 * 1024 * 1024           # double-buffered x
        target_block_bytes = 4 * 1024 * 1024
        lanes_budget = stream_budget // max(1, 2 * bytes_per_lane)
        lanes_target = target_block_bytes // max(1, bytes_per_lane)
        block_hw = min(lanes_budget, max(lanes_target, 128))
        block_hw = max(128, (block_hw // 128) * 128)
        block_hw = min(block_hw, 16384)           # bound chunk-loop trip count
        block_hw = min(block_hw, pl.cdiv(HW, 128) * 128)
    assert block_hw % 128 == 0 and block_hw >= 128

    num_blocks = pl.cdiv(HW, block_hw)

    if num_splits is None:
        num_splits = _default_num_splits()
    num_splits = max(1, min(int(num_splits), num_blocks))
    blocks_per_split = pl.cdiv(num_blocks, num_splits)

    # Explicit scoped-VMEM limit: actual need + headroom, kept well under
    # v7x's 64 MiB physical VMEM.
    # TODO(synk): for very large B*C (>~8K) add a channel-tiling grid axis so
    # the (B, C, 128) f32 scratch accumulators stay small.
    x_stream_bytes = 2 * B * C * block_hw * itemsize
    acc_bytes = 2 * B * C * 128 * 4
    vmem_limit = min(48 * 1024 * 1024,
                     max(16 * 1024 * 1024,
                         x_stream_bytes + acc_bytes + 4 * 1024 * 1024))

    reduce_kernel = _make_reduce_kernel(B, C, HW, block_hw, num_blocks,
                                        blocks_per_split, num_splits)

    def x_index_map(p, k):
        # Clamp so padding blocks from the parallel split never issue an
        # out-of-bounds DMA; their contribution is masked out in-kernel.
        g = p * blocks_per_split + k
        return (0, 0, jnp.minimum(g, num_blocks - 1))

    sum_partials, max_partials = pl.pallas_call(
        reduce_kernel,
        out_shape=(jax.ShapeDtypeStruct((num_splits, B, C), jnp.float32),
                   jax.ShapeDtypeStruct((num_splits, B, C), jnp.float32)),
        grid_spec=pltpu.PrefetchScalarGridSpec(
            num_scalar_prefetch=0,
            grid=(num_splits, blocks_per_split),
            in_specs=[pl.BlockSpec((B, C, block_hw), x_index_map)],
            out_specs=[pl.BlockSpec((1, B, C), lambda p, k: (p, 0, 0)),
                       pl.BlockSpec((1, B, C), lambda p, k: (p, 0, 0))],
            scratch_shapes=[
                pltpu.VMEM((B, C, 128), jnp.float32),   # running per-lane sum
                pltpu.VMEM((B, C, 128), jnp.float32),   # running per-lane max
            ],
        ),
        compiler_params=pltpu.CompilerParams(
            dimension_semantics=("parallel", "arbitrary"),
            vmem_limit_bytes=int(vmem_limit),
        ),
    )(x_flat)

    finalize_kernel = _make_finalize_kernel(HW)
    out = pl.pallas_call(
        finalize_kernel,
        out_shape=jax.ShapeDtypeStruct((B, C), x.dtype),
        grid=(1,),
        in_specs=[
            pl.BlockSpec((num_splits, B, C), lambda i: (0, 0, 0)),
            pl.BlockSpec((num_splits, B, C), lambda i: (0, 0, 0)),
            pl.BlockSpec((C, C_hidden), lambda i: (0, 0)),
            pl.BlockSpec((C_hidden, C), lambda i: (0, 0)),
        ],
        out_specs=pl.BlockSpec((B, C), lambda i: (0, 0)),
    )(sum_partials, max_partials, w1_mat, w2_mat)

    return out.reshape(B, C, 1, 1)


def channel_attention_ref(x, w1, w2):
    """Pure-JAX reference mirroring the PyTorch module (compute in f32)."""
    B, C, H, W = x.shape
    C_hidden = w1.shape[0]
    xf = x.astype(jnp.float32)
    avg = jnp.mean(xf, axis=(2, 3))          # (B, C)
    mx = jnp.max(xf, axis=(2, 3))            # (B, C)
    w1m = w1.reshape(C_hidden, C).astype(jnp.float32)
    w2m = w2.reshape(C, C_hidden).astype(jnp.float32)

    def fc(v):
        h = jnp.maximum(v @ w1m.T, 0.0)
        return h @ w2m.T

    out = jax.nn.sigmoid(fc(avg) + fc(mx)).reshape(B, C, 1, 1)
    return out.astype(x.dtype)


if __name__ == "__main__":
    key = jax.random.PRNGKey(0)
    kx1, kx2, k1, k2 = jax.random.split(key, 4)

    B, C, ratio = 2, 32, 16
    C_hidden = C // ratio

    w1 = jax.random.normal(k1, (C_hidden, C, 1, 1), jnp.float32) * (2.0 / C) ** 0.5
    w2 = jax.random.normal(k2, (C, C_hidden, 1, 1), jnp.float32) * (2.0 / max(C_hidden, 1)) ** 0.5

    # Case 1: HW=256, forced 128-wide tile, single split -> 2-step pipelined
    # reduction, no masking anywhere.
    x1 = jax.random.normal(kx1, (B, C, 16, 16), jnp.float32)
    out1 = jax.block_until_ready(
        channel_attention(x1, w1, w2, block_hw=128, num_splits=1))
    ref1 = channel_attention_ref(x1, w1, w2)
    assert out1.shape == (B, C, 1, 1)
    assert jnp.allclose(out1, ref1, atol=1e-5, rtol=1e-5)

    # Case 2: HW=169 (not a multiple of 128) -> tail block masked (last step only).
    x2 = jax.random.normal(kx2, (B, C, 13, 13), jnp.float32)
    out2 = jax.block_until_ready(
        channel_attention(x2, w1, w2, block_hw=128, num_splits=1))
    ref2 = channel_attention_ref(x2, w1, w2)
    assert jnp.allclose(out2, ref2, atol=1e-5, rtol=1e-5)

    # Case 3: forced 2-way parallel split (v7x dual-TC path) with a masked tail.
    out3 = jax.block_until_ready(
        channel_attention(x2, w1, w2, block_hw=128, num_splits=2))
    assert jnp.allclose(out3, ref2, atol=1e-5, rtol=1e-5)

    # Case 4: auto block sizing / auto split count, native bf16 stream with
    # f32 accumulation.
    x4 = x1.astype(jnp.bfloat16)
    out4 = jax.block_until_ready(channel_attention(x4, w1, w2))
    ref4 = channel_attention_ref(x4, w1, w2)
    assert jnp.allclose(out4.astype(jnp.float32), ref4.astype(jnp.float32),
                        atol=1e-2, rtol=1e-2)

    print("KERNEL_OK")
</pallas_src>

<mosaic_0001>
module attributes {stable_mosaic.version = 11 : i64} {
  func.func @kernel(%arg0: i32, %arg1: i32, %arg2: memref<2x32x128xf32, #tpu.memory_space<vmem>>, %arg3: memref<1x2x32xf32, #tpu.memory_space<vmem>>, %arg4: memref<1x2x32xf32, #tpu.memory_space<vmem>>, %arg5: memref<2x32x128xf32, #tpu.memory_space<vmem>>, %arg6: memref<2x32x128xf32, #tpu.memory_space<vmem>>) attributes {dimension_semantics = [#tpu.dimension_semantics<parallel>, #tpu.dimension_semantics<arbitrary>], iteration_bounds = array<i64: 1, 2>, scalar_prefetch = 0 : i64, scratch_operands = 2 : i64, tpu.core_type = #tpu.core_type<tc>, window_params = [{transform_indices = @transform_0, window_bounds = array<i64: 2, 32, 128>}, {transform_indices = @transform_1, window_bounds = array<i64: 1, 2, 32>}, {transform_indices = @transform_2, window_bounds = array<i64: 1, 2, 32>}]} {
    %c0_i32 = arith.constant 0 : i32
    %0 = arith.cmpi eq, %arg1, %c0_i32 : i32
    %1 = arith.extui %0 : i1 to i32
    %c0_i32_0 = arith.constant 0 : i32
    %2 = arith.cmpi ne, %1, %c0_i32_0 : i32
    scf.if %2 {
      %cst = arith.constant 0.000000e+00 : f32
      %16 = vector.broadcast %cst : f32 to vector<2x32x128xf32>
      %c0_17 = arith.constant 0 : index
      %c0_18 = arith.constant 0 : index
      %c0_19 = arith.constant 0 : index
      %17 = vector.load %arg5[%c0_17, %c0_18, %c0_19] : memref<2x32x128xf32, #tpu.memory_space<vmem>>, vector<2x32x128xf32>
      tpu.vector_store %arg5[%c0_17, %c0_18, %c0_19], %16 {strides = array<i32>} : memref<2x32x128xf32, #tpu.memory_space<vmem>>, vector<2x32x128xf32>,
      %cst_20 = arith.constant 0xFF800000 : f32
      %18 = vector.broadcast %cst_20 : f32 to vector<2x32x128xf32>
      %c0_21 = arith.constant 0 : index
      %c0_22 = arith.constant 0 : index
      %c0_23 = arith.constant 0 : index
      %19 = vector.load %arg6[%c0_21, %c0_22, %c0_23] : memref<2x32x128xf32, #tpu.memory_space<vmem>>, vector<2x32x128xf32>
      tpu.vector_store %arg6[%c0_21, %c0_22, %c0_23], %18 {strides = array<i32>} : memref<2x32x128xf32, #tpu.memory_space<vmem>>, vector<2x32x128xf32>,
    } else {
    }
    %c0 = arith.constant 0 : index
    %c0_1 = arith.constant 0 : index
    %c0_2 = arith.constant 0 : index
    %3 = vector.load %arg5[%c0, %c0_1, %c0_2] : memref<2x32x128xf32, #tpu.memory_space<vmem>>, vector<2x32x128xf32>
    %c0_3 = arith.constant 0 : index
    %c0_4 = arith.constant 0 : index
    %c0_5 = arith.constant 0 : index
    %4 = vector.load %arg6[%c0_3, %c0_4, %c0_5] : memref<2x32x128xf32, #tpu.memory_space<vmem>>, vector<2x32x128xf32>
    %c0_i32_6 = arith.constant 0 : i32
    %c128_i32 = arith.constant 128 : i32
    %5 = arith.muli %c0_i32_6, %c128_i32 : i32
    %6 = tpu.assume_multiple %5, 128 : i32
    %c0_7 = arith.constant 0 : index
    %c0_8 = arith.constant 0 : index
    %7 = arith.index_cast %6 : i32 to index
    %8 = vector.load %arg2[%c0_7, %c0_8, %7] : memref<2x32x128xf32, #tpu.memory_space<vmem>>, vector<2x32x128xf32>
    %9 = arith.addf %3, %8 : vector<2x32x128xf32>
    %10 = arith.maximumf %4, %8 : vector<2x32x128xf32>
    %c1_i32 = arith.constant 1 : i32
    %c0_9 = arith.constant 0 : index
    %c0_10 = arith.constant 0 : index
    %c0_11 = arith.constant 0 : index
    %11 = vector.load %arg5[%c0_9, %c0_10, %c0_11] : memref<2x32x128xf32, #tpu.memory_space<vmem>>, vector<2x32x128xf32>
    tpu.vector_store %arg5[%c0_9, %c0_10, %c0_11], %9 {strides = array<i32>} : memref<2x32x128xf32, #tpu.memory_space<vmem>>, vector<2x32x128xf32>,
    %c0_12 = arith.constant 0 : index
    %c0_13 = arith.constant 0 : index
    %c0_14 = arith.constant 0 : index
    %12 = vector.load %arg6[%c0_12, %c0_13, %c0_14] : memref<2x32x128xf32, #tpu.memory_space<vmem>>, vector<2x32x128xf32>
    tpu.vector_store %arg6[%c0_12, %c0_13, %c0_14], %10 {strides = array<i32>} : memref<2x32x128xf32, #tpu.memory_space<vmem>>, vector<2x32x128xf32>,
    %c1_i32_15 = arith.constant 1 : i32
    %13 = arith.cmpi eq, %arg1, %c1_i32_15 : i32
    %14 = arith.extui %13 : i1 to i32
    %c0_i32_16 = arith.constant 0 : i32
    %15 = arith.cmpi ne, %14, %c0_i32_16 : i32
    scf.if %15 {
      %c0_17 = arith.constant 0 : index
      %c0_18 = arith.constant 0 : index
      %c0_19 = arith.constant 0 : index
      %16 = vector.load %arg5[%c0_17, %c0_18, %c0_19] : memref<2x32x128xf32, #tpu.memory_space<vmem>>, vector<2x32x128xf32>
      %cst = arith.constant dense<0.000000e+00> : vector<2x32xf32>
      %17 = vector.multi_reduction <add>, %16, %cst [2] : vector<2x32x128xf32> to vector<2x32xf32>
      %c0_20 = arith.constant 0 : index
      %c0_21 = arith.constant 0 : index
      %c0_22 = arith.constant 0 : index
      %18 = vector.load %arg3[%c0_20, %c0_21, %c0_22] : memref<1x2x32xf32, #tpu.memory_space<vmem>>, vector<1x2x32xf32>
      %19 = vector.shape_cast %18 : vector<1x2x32xf32> to vector<2x32xf32>
      %20 = vector.shape_cast %17 : vector<2x32xf32> to vector<1x2x32xf32>
      tpu.vector_store %arg3[%c0_20, %c0_21, %c0_22], %20 {strides = array<i32>} : memref<1x2x32xf32, #tpu.memory_space<vmem>>, vector<1x2x32xf32>,
      %c0_23 = arith.constant 0 : index
      %c0_24 = arith.constant 0 : index
      %c0_25 = arith.constant 0 : index
      %21 = vector.load %arg6[%c0_23, %c0_24, %c0_25] : memref<2x32x128xf32, #tpu.memory_space<vmem>>, vector<2x32x128xf32>
      %cst_26 = arith.constant dense<0xFF800000> : vector<2x32xf32>
      %22 = vector.multi_reduction <maximumf>, %21, %cst_26 [2] : vector<2x32x128xf32> to vector<2x32xf32>
      %c0_27 = arith.constant 0 : index
      %c0_28 = arith.constant 0 : index
      %c0_29 = arith.constant 0 : index
      %23 = vector.load %arg4[%c0_27, %c0_28, %c0_29] : memref<1x2x32xf32, #tpu.memory_space<vmem>>, vector<1x2x32xf32>
      %24 = vector.shape_cast %23 : vector<1x2x32xf32> to vector<2x32xf32>
      %25 = vector.shape_cast %22 : vector<2x32xf32> to vector<1x2x32xf32>
      tpu.vector_store %arg4[%c0_27, %c0_28, %c0_29], %25 {strides = array<i32>} : memref<1x2x32xf32, #tpu.memory_space<vmem>>, vector<1x2x32xf32>,
    } else {
    }
    return
  }
  func.func @transform_0(%arg0: i32, %arg1: i32) -> (i32, i32, i32) {
    %c2_i32 = arith.constant 2 : i32
    %0 = arith.muli %arg0, %c2_i32 : i32
    %1 = arith.addi %0, %arg1 : i32
    %c1_i32 = arith.constant 1 : i32
    %2 = arith.minsi %1, %c1_i32 : i32
    %c0_i32 = arith.constant 0 : i32
    %c0_i32_0 = arith.constant 0 : i32
    %c0_i32_1 = arith.constant 0 : i32
    return %c0_i32, %c0_i32_0, %2 : i32, i32, i32
  }
  func.func @transform_1(%arg0: i32, %arg1: i32) -> (i32, i32, i32) {
    %c0_i32 = arith.constant 0 : i32
    %c0_i32_0 = arith.constant 0 : i32
    %c0_i32_1 = arith.constant 0 : i32
    return %arg0, %c0_i32, %c0_i32_0 : i32, i32, i32
  }
  func.func @transform_2(%arg0: i32, %arg1: i32) -> (i32, i32, i32) {
    %c0_i32 = arith.constant 0 : i32
    %c0_i32_0 = arith.constant 0 : i32
    %c0_i32_1 = arith.constant 0 : i32
    return %arg0, %c0_i32, %c0_i32_0 : i32, i32, i32
  }
}

</mosaic_0001>

<llo_original>
// kernel: tpu_custom_call.1
$region0: #{tpu_custom_call.1}
  #allocation0 [shape = 'u32[]', space=smem, size = 0x4, offset = 0x4, fixed_abs, tag = 'smem constant byte address 0x4 - core index']
  #allocation1 [shape = 'u32[144,128]{1,0:T(1,128)}', space=vmem, size = 0x12000, scoped, tag = 'internal scratch']
  #allocation2 [shape = 'f32[2,32,128]{2,1,0:T(8,128)}', space=vmem, size = 0x8000, scoped, tag = 'scratch operand']
  #allocation3 [shape = 'f32[2,32,128]{2,1,0:T(8,128)}', space=vmem, size = 0x8000, scoped, tag = 'scratch operand']
  %s0 = inlined_call_operand.hbm [shape: f32[2,32,256], index: 0, kind: input, shape index: {}]
  %s1 = inlined_call_operand.hbm [shape: f32[1,2,32], index: 1, kind: output, shape index: {0}]
  %s2 = inlined_call_operand.hbm [shape: f32[1,2,32], index: 2, kind: output, shape index: {1}]
  %3 = xla_tuple %s1, %s2
  %s4 = sld [smem:[#allocation0]]
  $region57: #{tpu_custom_call.1} parent=0
    _
  %s6 = ssub.s32 1, %s4
  %s7 = scalar_select 0, %s6, %s4
  $region1: #{tpu_custom_call.1} parent=0
    #allocation4 [shape = 'u8[65536]{0}', space=vmem, size = 0x10000, scoped, tag = 'input window, operand 0']
    #allocation5 [shape = 's32[2]{0}', space=sflag, size = 0x8, scoped, tag = 'scoped memory for tpu_custom_call.1']
    #allocation6 [shape = 's32[2]{0}', space=sflag, size = 0x8, scoped, tag = 'scoped memory for tpu_custom_call.1']
    #allocation7 [shape = 'u8[1024]{0}', space=vmem, size = 0x400, scoped, tag = 'output window, operand 0, single buffered']
    #allocation8 [shape = 'u8[1024]{0}', space=vmem, size = 0x400, scoped, tag = 'output window, operand 1, single buffered']
    #allocation9 [shape = 's32[1]{0}', space=sflag, size = 0x4, scoped, tag = 'scoped memory for tpu_custom_call.1']
    %8 = vsyncpa [#allocation5], 0
    %s9 = scalar_lea.sflag [#allocation5], 1
    %10 = vsyncpa %s9, 0
    %11 = vsyncpa [#allocation6], 0
    %12 = vsyncpa [#allocation9], 0
    loop: start=0, step=1, limit=4
    $region2: #{tpu_custom_call.1} parent=1 // loop_pre_header
      _
    $region3: #{tpu_custom_call.1} parent=1 // loop_header
      %s14 = sphi 0, %s18
      %p15 = scmp.ge.s32.totalorder %s14, 4
      %s21 = sphi 0, %s33
      %s22 = sphi 0, %s29
      %s23 = sphi 0, %s21
      %s24 = sphi 0, %s22
      %s25 = sphi 0, %s23
      %s26 = sphi 0, %s24
      %s44 = sphi 0, %s46
      %s47 = sphi 0, %s44
      %s48 = sphi 0, %s47
      %s64 = sphi 0, %s48
      %s70 = sphi 0, %s72
      %s73 = sphi 0, %s70
      %s74 = sphi 0, %s73
      %s90 = sphi 0, %s74
      %s96 = sphi 0, %s98
      %s99 = sphi 0, %s96
      %s100 = sphi 0, %s99
      %s116 = sphi 0, %s100
    $region4: #{tpu_custom_call.1} parent=1 // loop_header_branch
      %17 = sbr.rel (%p15) target = $region8
    $region5: #{tpu_custom_call.1} parent=1 // loop_body
      %s19 = ssub.s32 %s14, 1
      %s20 = ssub.s32 %s14, 2
      %s27 = sadd.s32 1, %s22
      %p28 = scmp.ge.s32.totalorder %s27, 2
      %s29 = scalar_select %p28, 0, %s27
      %s30 = sadd.s32 1, %s21
      %s31 = scalar_select %p28, %s30, %s21
      %p32 = scmp.ge.s32.totalorder %s31, 1
      %s33 = scalar_select %p32, 0, %s31
      %s34 = smul.u32 %s21, 2
      %s35 = sadd.s32 %s34, %s22
      %p36 = scmp.lt.s32.totalorder %s35, 1
      %s37 = scalar_select %p36, %s35, 1
      %s38 = smul.u32 %s33, 2
      %s39 = sadd.s32 %s38, %s29
      %p40 = scmp.lt.s32.totalorder %s39, 1
      %s41 = scalar_select %p40, %s39, 1
      %s42 = ssub.s32 %s37, %s41
      %p43 = scmp.eq.s32.totalorder %s42, 0
      %s45 = sadd.s32 %s44, 1
      %s46 = scalar_select %p43, %s44, %s45
      %p49 = pneg %p43
      %p50 = scmp.eq.s32.totalorder %s14, 1
      %p51 = por %p49, %p50
      %p52 = scmp.ne.s32.totalorder %s44, %s47
      %p53 = scmp.eq.s32.totalorder %s14, 0
      %p54 = por %p52, %p53
      %p55 = scmp.ne.s32.totalorder %s44, %s47
      %p56 = scmp.eq.s32.totalorder %s19, 1
      %p57 = por %p55, %p56
      %p58 = scmp.ne.s32.totalorder %s47, %s48
      %p59 = scmp.eq.s32.totalorder %s19, 0
      %p60 = por %p58, %p59
      %p61 = scmp.ne.s32.totalorder %s47, %s48
      %p62 = scmp.eq.s32.totalorder %s20, 1
      %p63 = por %p61, %p62
      %p65 = scmp.ne.s32.totalorder %s48, %s64
      %p66 = scmp.eq.s32.totalorder %s20, 0
      %p67 = por %p65, %p66
      %s68 = ssub.s32 %s21, %s33
      %p69 = scmp.eq.s32.totalorder %s68, 0
      %s71 = sadd.s32 %s70, 1
      %s72 = scalar_select %p69, %s70, %s71
      %p75 = pneg %p69
      %p76 = scmp.eq.s32.totalorder %s14, 1
      %p77 = por %p75, %p76
      %p78 = scmp.ne.s32.totalorder %s70, %s73
      %p79 = scmp.eq.s32.totalorder %s14, 0
      %p80 = por %p78, %p79
      %p81 = scmp.ne.s32.totalorder %s70, %s73
      %p82 = scmp.eq.s32.totalorder %s19, 1
      %p83 = por %p81, %p82
      %p84 = scmp.ne.s32.totalorder %s73, %s74
      %p85 = scmp.eq.s32.totalorder %s19, 0
      %p86 = por %p84, %p85
      %p87 = scmp.ne.s32.totalorder %s73, %s74
      %p88 = scmp.eq.s32.totalorder %s20, 1
      %p89 = por %p87, %p88
      %p91 = scmp.ne.s32.totalorder %s74, %s90
      %p92 = scmp.eq.s32.totalorder %s20, 0
      %p93 = por %p91, %p92
      %s94 = ssub.s32 %s21, %s33
      %p95 = scmp.eq.s32.totalorder %s94, 0
      %s97 = sadd.s32 %s96, 1
      %s98 = scalar_select %p95, %s96, %s97
      %p101 = pneg %p95
      %p102 = scmp.eq.s32.totalorder %s14, 1
      %p103 = por %p101, %p102
      %p104 = scmp.ne.s32.totalorder %s96, %s99
      %p105 = scmp.eq.s32.totalorder %s14, 0
      %p106 = por %p104, %p105
      %p107 = scmp.ne.s32.totalorder %s96, %s99
      %p108 = scmp.eq.s32.totalorder %s19, 1
      %p109 = por %p107, %p108
      %p110 = scmp.ne.s32.totalorder %s99, %s100
      %p111 = scmp.eq.s32.totalorder %s19, 0
      %p112 = por %p110, %p111
      %p113 = scmp.ne.s32.totalorder %s99, %s100
      %p114 = scmp.eq.s32.totalorder %s20, 1
      %p115 = por %p113, %p114
      %p117 = scmp.ne.s32.totalorder %s100, %s116
      %p118 = scmp.eq.s32.totalorder %s20, 0
      %p119 = por %p117, %p118
      %p120 = scmp.le.s32.totalorder 1, %s14
      %p121 = scmp.lt.s32.totalorder %s14, 3
      %p122 = pnand %p120, %p121
      %p123 = pneg %p122
      // Predicated region
      $region9: #{tpu_custom_call.1} parent=5 // pred_check
        _
      $region10: #{tpu_custom_call.1} parent=5 // pred_check_branch
        %125 = sbr.rel (%p122) target = $region12
      $region11: #{tpu_custom_call.1} parent=5 // pred_region
        %s126 = ssub.s32 %s14, 1
      $region12: #{tpu_custom_call.1} parent=5 // pred_fallthru
        _
      %p127 = scmp.lt.s32.totalorder %s14, 2
      // Predicated region
      $region13: #{tpu_custom_call.1} parent=5 // pred_check
        %p128 = pneg %p127
      $region14: #{tpu_custom_call.1} parent=5 // pred_check_branch
        %130 = sbr.rel (%p128) target = $region16
      $region15: #{tpu_custom_call.1} parent=5 // pred_region
        // Predicated region
        $region17: #{tpu_custom_call.1} parent=15 // pred_check
          %p131 = pneg %p54
        $region18: #{tpu_custom_call.1} parent=15 // pred_check_branch
          %133 = sbr.rel (%p131) target = $region20
        $region19: #{tpu_custom_call.1} parent=15 // pred_region
          %s134 = sand.u32 %s44, 1
          %s135 = scalar_lea.sflag [#allocation5], %s134
          %s136 = sand.u32 %s44, 1
          %s137 = smul.addr %s136, 64
          %s138 = scalar_lea.vmem [#allocation4], %s137
          %s139 = smul.u32 %s21, 2
          %s140 = sadd.s32 %s139, %s22
          %p141 = scmp.lt.s32.totalorder %s140, 1
          %s142 = scalar_select %p141, %s140, 1
          %s144 = ssub.s32 1024, 1024
          %145 = vsyncadd %s135, %s144
          %s146 = smul.addr %s142, 128
          %s147 = scalar_lea.hbm %s0, %s146
          %s148 = sshll.u32 %s138, 4
          %s149 = int_to_ptr.vmem [resolvable:$true] %s148
          %154 = dma.hbm_to_vmem [thread:$0]  %s147, 1024, %s149, %s135, 256, 128, 8
        $region20: #{tpu_custom_call.1} parent=15 // pred_fallthru
          _
      $region16: #{tpu_custom_call.1} parent=5 // pred_fallthru
        _
      %p155 = scmp.le.s32.totalorder 1, %s14
      %p156 = scmp.lt.s32.totalorder %s14, 3
      %p157 = pnand %p155, %p156
      %p158 = pneg %p157
      // Predicated region
      $region21: #{tpu_custom_call.1} parent=5 // pred_check
        _
      $region22: #{tpu_custom_call.1} parent=5 // pred_check_branch
        %160 = sbr.rel (%p157) target = $region24
      $region23: #{tpu_custom_call.1} parent=5 // pred_region
        %s161 = ssub.s32 %s14, 1
        %s162 = sand.u32 %s47, 1
        %s163 = scalar_lea.sflag [#allocation5], %s162
        %s164 = sand.u32 %s47, 1
        %s165 = smul.addr %s164, 64
        %s166 = scalar_lea.vmem [#allocation4], %s165
        // Predicated region
        $region25: #{tpu_custom_call.1} parent=23 // pred_check
          %p167 = pneg %p60
        $region26: #{tpu_custom_call.1} parent=23 // pred_check_branch
          %169 = sbr.rel (%p167) target = $region28
        $region27: #{tpu_custom_call.1} parent=23 // pred_region
          %170 = dma.done %s163, 1024
        $region28: #{tpu_custom_call.1} parent=23 // pred_fallthru
          _
        %s171 = sand.u32 %s47, 1
        %s172 = scalar_lea.sflag [#allocation5], %s171
        %s173 = sand.u32 %s47, 1
        %s174 = smul.addr %s173, 64
        %s175 = scalar_lea.vmem [#allocation4], %s174
        %p176 = pneg %p60
        %p177 = pneg %p57
        %p178 = pneg %p86
        %p179 = pneg %p83
        %p180 = pneg %p112
        %p181 = pneg %p109
        %s182 = smul.u32 %s23, 2
        %s183 = sadd.s32 %s182, %s24
        %p184 = scmp.lt.s32.totalorder %s183, 1
        %s185 = scalar_select %p184, %s183, 1
        %p186 = scmp.eq.s32.totalorder %s24, 0
        // Predicated region
        $region29: #{tpu_custom_call.1} parent=23 // pred_check
          %p187 = pneg %p186
        $region30: #{tpu_custom_call.1} parent=23 // pred_check_branch
          %189 = sbr.rel (%p187) target = $region32
        $region31: #{tpu_custom_call.1} parent=23 // pred_region
          %190 = vst [vmem:[#allocation2] sm:$0xff] 0.0
          %191 = vst [vmem:[#allocation2 + $0x8] sm:$0xff] 0.0
          %192 = vst [vmem:[#allocation2 + $0x10] sm:$0xff] 0.0
          %193 = vst [vmem:[#allocation2 + $0x18] sm:$0xff] 0.0
          %194 = vst [vmem:[#allocation2 + $0x20] sm:$0xff] 0.0
          %195 = vst [vmem:[#allocation2 + $0x28] sm:$0xff] 0.0
          %196 = vst [vmem:[#allocation2 + $0x30] sm:$0xff] 0.0
          %197 = vst [vmem:[#allocation2 + $0x38] sm:$0xff] 0.0
          %198 = vst [vmem:[#allocation3] sm:$0xff] -inf
          %199 = vst [vmem:[#allocation3 + $0x8] sm:$0xff] -inf
          %200 = vst [vmem:[#allocation3 + $0x10] sm:$0xff] -inf
          %201 = vst [vmem:[#allocation3 + $0x18] sm:$0xff] -inf
          %202 = vst [vmem:[#allocation3 + $0x20] sm:$0xff] -inf
          %203 = vst [vmem:[#allocation3 + $0x28] sm:$0xff] -inf
          %204 = vst [vmem:[#allocation3 + $0x30] sm:$0xff] -inf
          %205 = vst [vmem:[#allocation3 + $0x38] sm:$0xff] -inf
        $region32: #{tpu_custom_call.1} parent=23 // pred_fallthru
          _
        %v206 = vld [vmem:[#allocation2] sm:$0xff]
        %v207 = vld [vmem:[#allocation2 + $0x8] sm:$0xff]
        %v208 = vld [vmem:[#allocation2 + $0x10] sm:$0xff]
        %v209 = vld [vmem:[#allocation2 + $0x18] sm:$0xff]
        %v210 = vld [vmem:[#allocation2 + $0x20] sm:$0xff]
        %v211 = vld [vmem:[#allocation2 + $0x28] sm:$0xff]
        %v212 = vld [vmem:[#allocation2 + $0x30] sm:$0xff]
        %v213 = vld [vmem:[#allocation2 + $0x38] sm:$0xff]
        %v214 = vld [vmem:[#allocation3] sm:$0xff]
        %v215 = vld [vmem:[#allocation3 + $0x8] sm:$0xff]
        %v216 = vld [vmem:[#allocation3 + $0x10] sm:$0xff]
        %v217 = vld [vmem:[#allocation3 + $0x18] sm:$0xff]
        %v218 = vld [vmem:[#allocation3 + $0x20] sm:$0xff]
        %v219 = vld [vmem:[#allocation3 + $0x28] sm:$0xff]
        %v220 = vld [vmem:[#allocation3 + $0x30] sm:$0xff]
        %v221 = vld [vmem:[#allocation3 + $0x38] sm:$0xff]
        %v222 = vld [vmem:[%s166] sm:$0xff]
        %v223 = vld [vmem:[%s166 + $0x8] sm:$0xff]
        %v224 = vld [vmem:[%s166 + $0x10] sm:$0xff]
        %v225 = vld [vmem:[%s166 + $0x18] sm:$0xff]
        %v226 = vld [vmem:[%s166 + $0x20] sm:$0xff]
        %v227 = vld [vmem:[%s166 + $0x28] sm:$0xff]
        %v228 = vld [vmem:[%s166 + $0x30] sm:$0xff]
        %v229 = vld [vmem:[%s166 + $0x38] sm:$0xff]
        %v230 = vadd.f32 %v206, %v222
        %v231 = vadd.f32 %v207, %v223
        %v232 = vadd.f32 %v208, %v224
        %v233 = vadd.f32 %v209, %v225
        %v234 = vadd.f32 %v210, %v226
        %v235 = vadd.f32 %v211, %v227
        %v236 = vadd.f32 %v212, %v228
        %v237 = vadd.f32 %v213, %v229
        %v238 = vmax.f32 %v214, %v222
        %v239 = vmax.f32 %v215, %v223
        %v240 = vmax.f32 %v216, %v224
        %v241 = vmax.f32 %v217, %v225
        %v242 = vmax.f32 %v218, %v226
        %v243 = vmax.f32 %v219, %v227
        %v244 = vmax.f32 %v220, %v228
        %v245 = vmax.f32 %v221, %v229
        %246 = vst [vmem:[#allocation2] sm:$0xff] %v230
        %247 = vst [vmem:[#allocation2 + $0x8] sm:$0xff] %v231
        %248 = vst [vmem:[#allocation2 + $0x10] sm:$0xff] %v232
        %249 = vst [vmem:[#allocation2 + $0x18] sm:$0xff] %v233
        %250 = vst [vmem:[#allocation2 + $0x20] sm:$0xff] %v234
        %251 = vst [vmem:[#allocation2 + $0x28] sm:$0xff] %v235
        %252 = vst [vmem:[#allocation2 + $0x30] sm:$0xff] %v236
        %253 = vst [vmem:[#allocation2 + $0x38] sm:$0xff] %v237
        %254 = vst [vmem:[#allocation3] sm:$0xff] %v238
        %255 = vst [vmem:[#allocation3 + $0x8] sm:$0xff] %v239
        %256 = vst [vmem:[#allocation3 + $0x10] sm:$0xff] %v240
        %257 = vst [vmem:[#allocation3 + $0x18] sm:$0xff] %v241
        %258 = vst [vmem:[#allocation3 + $0x20] sm:$0xff] %v242
        %259 = vst [vmem:[#allocation3 + $0x28] sm:$0xff] %v243
        %260 = vst [vmem:[#allocation3 + $0x30] sm:$0xff] %v244
        %261 = vst [vmem:[#allocation3 + $0x38] sm:$0xff] %v245
        %p262 = scmp.eq.s32.totalorder %s24, 1
        // Predicated region
        $region33: #{tpu_custom_call.1} parent=23 // pred_check
          %p263 = pneg %p262
        $region34: #{tpu_custom_call.1} parent=23 // pred_check_branch
          %265 = sbr.rel (%p263) target = $region36
        $region35: #{tpu_custom_call.1} parent=23 // pred_region
          %v266 = vld [vmem:[#allocation2] sm:$0xff]
          %v267 = vld [vmem:[#allocation2 + $0x8] sm:$0xff]
          %v268 = vld [vmem:[#allocation2 + $0x10] sm:$0xff]
          %v269 = vld [vmem:[#allocation2 + $0x18] sm:$0xff]
          %v270 = vld [vmem:[#allocation2 + $0x20] sm:$0xff]
          %v271 = vld [vmem:[#allocation2 + $0x28] sm:$0xff]
          %v272 = vld [vmem:[#allocation2 + $0x30] sm:$0xff]
          %v273 = vld [vmem:[#allocation2 + $0x38] sm:$0xff]
          %274 = vadd.xlane.f32.xlu0 %v266
          %v275 = vpop.xlane.xlu0 %274
          %276 = vadd.xlane.f32.xlu0 %v267
          %v277 = vpop.xlane.xlu0 %276
          %278 = vadd.xlane.f32.xlu0 %v268
          %v279 = vpop.xlane.xlu0 %278
          %280 = vadd.xlane.f32.xlu0 %v269
          %v281 = vpop.xlane.xlu0 %280
          %282 = vadd.xlane.f32.xlu0 %v270
          %v283 = vpop.xlane.xlu0 %282
          %284 = vadd.xlane.f32.xlu0 %v271
          %v285 = vpop.xlane.xlu0 %284
          %286 = vadd.xlane.f32.xlu0 %v272
          %v287 = vpop.xlane.xlu0 %286
          %288 = vadd.xlane.f32.xlu0 %v273
          %v289 = vpop.xlane.xlu0 %288
          %v298 = vlaneseq
          %v299 = vand.u32 %v298, 127
          %v300 = vlaneseq
          %v301 = vshrl.u32 %v300, 7
          %v302 = vsub.s32 %v299, %v301
          %v303 = vrot.slane %v275, %v302
          %v304 = vadd.s32 %v299, 4294967288
          %v305 = vlaneseq
          %v306 = vshrl.u32 %v305, 7
          %v307 = vsub.s32 %v304, %v306
          %v308 = vrot.slane %v277, %v307
          %vm309 = vcmask 130112
          %v310 = vsel %vm309, %v308, %v303
          %v311 = vadd.s32 %v299, 4294967280
          %v312 = vlaneseq
          %v313 = vshrl.u32 %v312, 7
          %v314 = vsub.s32 %v311, %v313
          %v315 = vrot.slane %v279, %v314
          %vm316 = vcmask 195712
          %v317 = vsel %vm316, %v315, %v310
          %v318 = vadd.s32 %v299, 4294967272
          %v319 = vlaneseq
          %v320 = vshrl.u32 %v319, 7
          %v321 = vsub.s32 %v318, %v320
          %v322 = vrot.slane %v281, %v321
          %vm323 = vcmask 261312
          %v324 = vsel %vm323, %v322, %v317
          %v325 = vlaneseq
          %v326 = vshrl.u32 %v325, 7
          %v327 = vsub.s32 %v299, %v326
          %v328 = vrot.slane %v283, %v327
          %v329 = vlaneseq
          %v330 = vshrl.u32 %v329, 7
          %v331 = vsub.s32 %v304, %v330
          %v332 = vrot.slane %v285, %v331
          %v333 = vsel %vm309, %v332, %v328
          %v334 = vlaneseq
          %v335 = vshrl.u32 %v334, 7
          %v336 = vsub.s32 %v311, %v335
          %v337 = vrot.slane %v287, %v336
          %v338 = vsel %vm316, %v337, %v333
          %v339 = vlaneseq
          %v340 = vshrl.u32 %v339, 7
          %v341 = vsub.s32 %v318, %v340
          %v342 = vrot.slane %v289, %v341
          %v343 = vsel %vm323, %v342, %v338
          %vm344 = vcmask 1041409
          %v345 = vsel %vm344, %v343, %v324
          %vm347 = vcmask 254976
          %348 = vst.msk [vmem:[#allocation7] sm:$0x3] %vm347, %v345
          %v349 = vld [vmem:[#allocation3] sm:$0xff]
          %v350 = vld [vmem:[#allocation3 + $0x8] sm:$0xff]
          %v351 = vld [vmem:[#allocation3 + $0x10] sm:$0xff]
          %v352 = vld [vmem:[#allocation3 + $0x18] sm:$0xff]
          %v353 = vld [vmem:[#allocation3 + $0x20] sm:$0xff]
          %v354 = vld [vmem:[#allocation3 + $0x28] sm:$0xff]
          %v355 = vld [vmem:[#allocation3 + $0x30] sm:$0xff]
          %v356 = vld [vmem:[#allocation3 + $0x38] sm:$0xff]
          %357 = vmax.xlane.f32.xlu0 %v349
          %v358 = vpop.xlane.xlu0 %357
          %359 = vmax.xlane.f32.xlu0 %v350
          %v360 = vpop.xlane.xlu0 %359
          %361 = vmax.xlane.f32.xlu0 %v351
          %v362 = vpop.xlane.xlu0 %361
          %363 = vmax.xlane.f32.xlu0 %v352
          %v364 = vpop.xlane.xlu0 %363
          %365 = vmax.xlane.f32.xlu0 %v353
          %v366 = vpop.xlane.xlu0 %365
          %367 = vmax.xlane.f32.xlu0 %v354
          %v368 = vpop.xlane.xlu0 %367
          %369 = vmax.xlane.f32.xlu0 %v355
          %v370 = vpop.xlane.xlu0 %369
          %371 = vmax.xlane.f32.xlu0 %v356
          %v372 = vpop.xlane.xlu0 %371
          %v381 = vlaneseq
          %v382 = vshrl.u32 %v381, 7
          %v383 = vsub.s32 %v299, %v382
          %v384 = vrot.slane %v358, %v383
          %v385 = vlaneseq
          %v386 = vshrl.u32 %v385, 7
          %v387 = vsub.s32 %v304, %v386
          %v388 = vrot.slane %v360, %v387
          %v389 = vsel %vm309, %v388, %v384
          %v390 = vlaneseq
          %v391 = vshrl.u32 %v390, 7
          %v392 = vsub.s32 %v311, %v391
          %v393 = vrot.slane %v362, %v392
          %v394 = vsel %vm316, %v393, %v389
          %v395 = vlaneseq
          %v396 = vshrl.u32 %v395, 7
          %v397 = vsub.s32 %v318, %v396
          %v398 = vrot.slane %v364, %v397
          %v399 = vsel %vm323, %v398, %v394
          %v400 = vlaneseq
          %v401 = vshrl.u32 %v400, 7
          %v402 = vsub.s32 %v299, %v401
          %v403 = vrot.slane %v366, %v402
          %v404 = vlaneseq
          %v405 = vshrl.u32 %v404, 7
          %v406 = vsub.s32 %v304, %v405
          %v407 = vrot.slane %v368, %v406
          %v408 = vsel %vm309, %v407, %v403
          %v409 = vlaneseq
          %v410 = vshrl.u32 %v409, 7
          %v411 = vsub.s32 %v311, %v410
          %v412 = vrot.slane %v370, %v411
          %v413 = vsel %vm316, %v412, %v408
          %v414 = vlaneseq
          %v415 = vshrl.u32 %v414, 7
          %v416 = vsub.s32 %v318, %v415
          %v417 = vrot.slane %v372, %v416
          %v418 = vsel %vm323, %v417, %v413
          %v419 = vsel %vm344, %v418, %v399
          %421 = vst.msk [vmem:[#allocation8] sm:$0x3] %vm347, %v419
        $region36: #{tpu_custom_call.1} parent=23 // pred_fallthru
          _
        // Predicated region
        $region37: #{tpu_custom_call.1} parent=23 // pred_check
          %p422 = pneg %p83
        $region38: #{tpu_custom_call.1} parent=23 // pred_check_branch
          %424 = sbr.rel (%p422) target = $region40
        $region39: #{tpu_custom_call.1} parent=23 // pred_region
          %s426 = ssub.s32 32, 32
          %427 = vsyncadd [#allocation6], %s426
          %s428 = smul.addr %s23, 32
          %s429 = scalar_lea.hbm %s1, %s428
          %s431 = sshll.u32 [#allocation7], 4
          %s432 = int_to_ptr.vmem [resolvable:$true] %s431
          %434 = dma.vmem_to_hbm [thread:$0]  %s432, 32, %s429, [#allocation6]
        $region40: #{tpu_custom_call.1} parent=23 // pred_fallthru
          _
        // Predicated region
        $region41: #{tpu_custom_call.1} parent=23 // pred_check
          %p435 = pneg %p109
        $region42: #{tpu_custom_call.1} parent=23 // pred_check_branch
          %437 = sbr.rel (%p435) target = $region44
        $region43: #{tpu_custom_call.1} parent=23 // pred_region
          %s439 = ssub.s32 32, 32
          %440 = vsyncadd [#allocation9], %s439
          %s441 = smul.addr %s23, 32
          %s442 = scalar_lea.hbm %s2, %s441
          %s444 = sshll.u32 [#allocation8], 4
          %s445 = int_to_ptr.vmem [resolvable:$true] %s444
          %447 = dma.vmem_to_hbm [thread:$0]  %s445, 32, %s442, [#allocation9]
        $region44: #{tpu_custom_call.1} parent=23 // pred_fallthru
          _
        // Predicated region
        $region45: #{tpu_custom_call.1} parent=23 // pred_check
          %p448 = pneg %p83
        $region46: #{tpu_custom_call.1} parent=23 // pred_check_branch
          %450 = sbr.rel (%p448) target = $region48
        $region47: #{tpu_custom_call.1} parent=23 // pred_region
          %451 = dma.done [#allocation6], 32
        $region48: #{tpu_custom_call.1} parent=23 // pred_fallthru
          _
        // Predicated region
        $region49: #{tpu_custom_call.1} parent=23 // pred_check
          %p452 = pneg %p109
        $region50: #{tpu_custom_call.1} parent=23 // pred_check_branch
          %454 = sbr.rel (%p452) target = $region52
        $region51: #{tpu_custom_call.1} parent=23 // pred_region
          %455 = dma.done [#allocation9], 32
        $region52: #{tpu_custom_call.1} parent=23 // pred_fallthru
          _
      $region24: #{tpu_custom_call.1} parent=5 // pred_fallthru
        _
      %p456 = scmp.le.s32.totalorder 2, %s14
      // Predicated region
      $region53: #{tpu_custom_call.1} parent=5 // pred_check
        %p457 = pneg %p456
      $region54: #{tpu_custom_call.1} parent=5 // pred_check_branch
        %459 = sbr.rel (%p457) target = $region56
      $region55: #{tpu_custom_call.1} parent=5 // pred_region
        %s460 = ssub.s32 %s14, 2
      $region56: #{tpu_custom_call.1} parent=5 // pred_fallthru
        _
    $region6: #{tpu_custom_call.1} parent=1 // loop_footer
      %s18 = sadd.s32 1, %s14
    $region7: #{tpu_custom_call.1} parent=1 // loop_footer_branch
      %13 = sbr.rel target = $region3
    $region8: #{tpu_custom_call.1} parent=1 // loop_exit
      _
    %461 = vsyncpa [#allocation5], 1
    %s462 = scalar_lea.sflag [#allocation5], 1
    %463 = vsyncpa %s462, 1
    %464 = vsyncpa [#allocation6], 1
    %s465 = scalar_lea.sflag [#allocation6], 1
    %466 = vsyncpa %s465, 1
    %467 = vsyncpa [#allocation9], 1

</llo_original>
